<compile_context>
chip_gen: v5e
topology: v5e:2x2
jax: 0.10.0
libtpu: 0.0.40
codegen_flags: <defaults>
</compile_context>

<pallas_src>
import functools

import jax
import jax.numpy as jnp
from jax import lax
from jax.experimental import pallas as pl
from jax.experimental.pallas import tpu as pltpu


_NT_DIMS = (((1,), (1,)), ((), ()))   # contract the last dim of both operands ("NT" matmul)


def _mlp_kernel(x_ref, w1_ref, b1_ref, w2_ref, b2_ref, w3_ref, b3_ref, o_ref):
    # x_ref : (bb, state_dim)   natural layout (no wrapper transpose)
    # w1_ref: (h1, state_dim)   torch (out, in) layout       b1_ref: (h1, 1)
    # w2_ref: (h2, h1)                                        b2_ref: (h2, 1)
    # w3_ref: (h2, 1)  final-layer weight column              b3_ref: (1, 1)
    x = x_ref[...].astype(w1_ref.dtype)
    # Layer 1 on the MXU: contract state_dim of both operands -> (h1, bb).  Batch ends up on
    # lanes without materializing x^T in the wrapper (rhs transposition handled in-kernel).
    h1 = lax.dot_general(w1_ref[...], x, _NT_DIMS,
                         preferred_element_type=jnp.float32)
    h1 = (h1 + b1_ref[...]).astype(w2_ref.dtype)
    h1 = jnp.maximum(h1, 0)                       # packed bf16 ReLU when compute dtype is bf16
    # Layer 2 on the MXU: (h2, h1) @ (h1, bb) -> (h2, bb), f32 accumulation.
    h2 = jnp.dot(w2_ref[...], h1, preferred_element_type=jnp.float32) + b2_ref[...]
    h2 = jnp.maximum(h2, 0.0)                     # f32: feeds the final reduce
    # Layer 3 (h2 -> 1) on VPU/XLU: multiply by the weight column, reduce over sublanes.
    # Result is already a lane-dense (1, bb) row -> unmasked stores.
    r = jnp.sum(h2 * w3_ref[...], axis=0, keepdims=True) + b3_ref[...]
    o_ref[...] = r.astype(o_ref.dtype)


def _round_up(x, m):
    return -(-x // m) * m


def _num_tensorcores():
    # v7x has 2 TensorCores per chip; v5e/v6e have 1.  Cheap trace-time query.
    try:
        kind = jax.devices()[0].device_kind.lower()
    except Exception:  # pragma: no cover
        return 1
    return 2 if ("v7" in kind or "7x" in kind) else 1


def _pick_block_b(batch, num_cores, max_block=2048):
    """128-aligned batch tile.  Single-TC chips: whole batch in one tile (per-grid-step
    overhead ~0.35 us dominates at this size).  Multi-TC chips: exactly num_cores tiles."""
    bp = _round_up(batch, 128)
    if num_cores >= 2 and bp >= num_cores * 128:
        return min(_round_up(-(-bp // num_cores), 128), max_block)
    return min(bp, max_block)


@functools.partial(jax.jit, static_argnames=("block_b", "compute_dtype"))
def reward_model_forward(x, params, *, block_b=None, compute_dtype=jnp.bfloat16):
    """x: [B, state_dim] f32 -> [B, 1] f32 (same semantics as RewardModel.forward)."""
    w1, b1, w2, b2, w3, b3 = params
    B, state_dim = x.shape
    h1 = w1.shape[0]
    h2 = w2.shape[0]

    if block_b is None:
        block_b = _pick_block_b(B, _num_tensorcores())
    num_tiles = -(-B // block_b)
    Bp = num_tiles * block_b
    if Bp != B:
        # Zero-pad ragged batches to a 128-multiple tile; padded rows are sliced off below.
        x = jnp.pad(x, ((0, Bp - B), (0, 0)))

    # bf16 MXU inputs with f32 accumulation (one-time ~300 KB weight cast).  x itself is
    # cast inside the kernel, so there is no extra wrapper pass over the activations.
    if compute_dtype != jnp.float32:
        w1 = w1.astype(compute_dtype)
        w2 = w2.astype(compute_dtype)

    in_specs = [
        pl.BlockSpec((block_b, state_dim), lambda i: (i, 0)),   # x batch tile (natural layout)
        pl.BlockSpec((h1, state_dim), lambda i: (0, 0)),        # W1 (resident in VMEM)
        pl.BlockSpec((h1, 1), lambda i: (0, 0)),                # b1 column
        pl.BlockSpec((h2, h1), lambda i: (0, 0)),               # W2 (resident in VMEM)
        pl.BlockSpec((h2, 1), lambda i: (0, 0)),                # b2 column
        pl.BlockSpec((h2, 1), lambda i: (0, 0)),                # w3 column
        pl.BlockSpec((1, 1), lambda i: (0, 0)),                 # b3
    ]
    out_spec = pl.BlockSpec((1, block_b), lambda i: (0, i))     # lane-dense output row

    weight_bytes = sum(int(a.size) * a.dtype.itemsize for a in (w1, b1, w2, b2, w3, b3))
    cost = pl.CostEstimate(
        flops=2 * Bp * (state_dim * h1 + h1 * h2 + h2),
        transcendentals=0,
        bytes_accessed=Bp * state_dim * x.dtype.itemsize + Bp * 4 + weight_bytes,
    )

    out = pl.pallas_call(
        _mlp_kernel,
        out_shape=jax.ShapeDtypeStruct((1, Bp), jnp.float32),
        grid_spec=pltpu.PrefetchScalarGridSpec(
            num_scalar_prefetch=0,
            grid=(num_tiles,),
            in_specs=in_specs,
            out_specs=out_spec,
        ),
        compiler_params=pltpu.CompilerParams(
            dimension_semantics=("parallel",),
        ),
        cost_estimate=cost,
    )(x, w1, b1, w2, b2, w3, b3)

    return out[0, :B][:, None]                    # (B, 1)


def init_params(key, state_dim, hidden_dims=(256, 256)):
    """PyTorch nn.Linear-style init.  Weights in torch (out, in) layout, biases as (out, 1)
    columns; the last layer's weight is stored as an (hidden, 1) column."""
    dims = [state_dim] + list(hidden_dims) + [1]
    raw = []
    for din, dout in zip(dims[:-1], dims[1:]):
        key, kw, kb = jax.random.split(key, 3)
        bound = 1.0 / (din ** 0.5)
        w = jax.random.uniform(kw, (dout, din), jnp.float32, -bound, bound)
        b = jax.random.uniform(kb, (dout, 1), jnp.float32, -bound, bound)
        raw.append((w, b))
    (w1, b1), (w2, b2), (w3, b3) = raw
    return (w1, b1, w2, b2, w3.T, b3.reshape(1, 1))


def reference_forward(x, params):
    w1, b1, w2, b2, w3c, b3 = params
    h = jnp.maximum(x @ w1.T + b1.T, 0.0)
    h = jnp.maximum(h @ w2.T + b2.T, 0.0)
    return h @ w3c + b3


if __name__ == "__main__":
    key = jax.random.PRNGKey(0)
    k_params, k_x, k_x2 = jax.random.split(key, 3)

    state_dim = 32
    hidden_dims = (256, 256)
    params = init_params(k_params, state_dim, hidden_dims)

    # Small batch: padded to one lane-dense 128-wide tile.  bf16 MXU default (f32 accumulate),
    # so compare against the f32 reference with a loose tolerance.
    x_small = jax.random.normal(k_x, (8, state_dim), jnp.float32)
    out_small = jax.block_until_ready(reward_model_forward(x_small, params))
    ref_small = reference_forward(x_small, params)
    assert out_small.shape == (8, 1)
    assert jnp.allclose(out_small, ref_small, rtol=2e-2, atol=2e-2), "bf16 small-batch mismatch"

    # f32 opt-in path: tight tolerance against the f32 reference.
    out_small_f32 = jax.block_until_ready(
        reward_model_forward(x_small, params, compute_dtype=jnp.float32))
    assert jnp.allclose(out_small_f32, ref_small, rtol=1e-4, atol=1e-4), "f32 small-batch mismatch"

    # Ragged batch with an explicit small block: exercises the multi-tile grid + zero padding.
    x_big = jax.random.normal(k_x2, (200, state_dim), jnp.float32)
    ref_big = reference_forward(x_big, params)
    out_big = jax.block_until_ready(reward_model_forward(x_big, params, block_b=128))
    assert out_big.shape == (200, 1)
    assert jnp.allclose(out_big, ref_big, rtol=2e-2, atol=2e-2), "tiled-batch mismatch"

    # Auto block_b on the same batch (single tile on v5e/v6e, two tiles on v7x).
    out_big_auto = jax.block_until_ready(reward_model_forward(x_big, params))
    assert jnp.allclose(out_big_auto, ref_big, rtol=2e-2, atol=2e-2), "auto-block mismatch"

    print("KERNEL_OK")
</pallas_src>

<mosaic_0001>
module attributes {stable_mosaic.version = 11 : i64} {
  func.func @_mlp_kernel(%arg0: i32, %arg1: memref<128x32xf32, #tpu.memory_space<vmem>>, %arg2: memref<256x32xbf16, #tpu.memory_space<vmem>>, %arg3: memref<256x1xf32, #tpu.memory_space<vmem>>, %arg4: memref<256x256xbf16, #tpu.memory_space<vmem>>, %arg5: memref<256x1xf32, #tpu.memory_space<vmem>>, %arg6: memref<256x1xf32, #tpu.memory_space<vmem>>, %arg7: memref<1x1xf32, #tpu.memory_space<vmem>>, %arg8: memref<1x128xf32, #tpu.memory_space<vmem>>) attributes {dimension_semantics = [#tpu.dimension_semantics<parallel>], iteration_bounds = array<i64: 1>, scalar_prefetch = 0 : i64, scratch_operands = 0 : i64, tpu.core_type = #tpu.core_type<tc>, window_params = [{transform_indices = @transform_0, window_bounds = array<i64: 128, 32>}, {pipeline_mode = #tpu.pipeline_mode<synchronous>, transform_indices = @transform_1, window_bounds = array<i64: 256, 32>}, {pipeline_mode = #tpu.pipeline_mode<synchronous>, transform_indices = @transform_2, window_bounds = array<i64: 256, 1>}, {pipeline_mode = #tpu.pipeline_mode<synchronous>, transform_indices = @transform_3, window_bounds = array<i64: 256, 256>}, {pipeline_mode = #tpu.pipeline_mode<synchronous>, transform_indices = @transform_4, window_bounds = array<i64: 256, 1>}, {pipeline_mode = #tpu.pipeline_mode<synchronous>, transform_indices = @transform_5, window_bounds = array<i64: 256, 1>}, {pipeline_mode = #tpu.pipeline_mode<synchronous>, transform_indices = @transform_6, window_bounds = array<i64: 1, 1>}, {transform_indices = @transform_7, window_bounds = array<i64: 1, 128>}]} {
    %c0 = arith.constant 0 : index
    %c0_0 = arith.constant 0 : index
    %0 = vector.load %arg1[%c0, %c0_0] : memref<128x32xf32, #tpu.memory_space<vmem>>, vector<128x32xf32>
    %1 = arith.truncf %0 : vector<128x32xf32> to vector<128x32xbf16>
    %c0_1 = arith.constant 0 : index
    %c0_2 = arith.constant 0 : index
    %2 = vector.load %arg2[%c0_1, %c0_2] : memref<256x32xbf16, #tpu.memory_space<vmem>>, vector<256x32xbf16>
    %cst = arith.constant dense<0.000000e+00> : vector<256x128xf32>
    %3 = tpu.matmul %2, %1, %cst {dimension_numbers = #tpu.dot_dimension_numbers<[1], [1], [0], [0], [0, 0, 1, 0], [], []>} : vector<256x32xbf16>, vector<128x32xbf16>, vector<256x128xf32> -> vector<256x128xf32>
    %c0_3 = arith.constant 0 : index
    %c0_4 = arith.constant 0 : index
    %4 = vector.load %arg3[%c0_3, %c0_4] : memref<256x1xf32, #tpu.memory_space<vmem>>, vector<256x1xf32>
    %5 = vector.broadcast %4 : vector<256x1xf32> to vector<256x128xf32>
    %6 = arith.addf %3, %5 : vector<256x128xf32>
    %7 = arith.truncf %6 : vector<256x128xf32> to vector<256x128xbf16>
    %cst_5 = arith.constant 0.000000e+00 : bf16
    %8 = vector.broadcast %cst_5 : bf16 to vector<256x128xbf16>
    %9 = arith.maximumf %7, %8 : vector<256x128xbf16>
    %c0_6 = arith.constant 0 : index
    %c0_7 = arith.constant 0 : index
    %10 = vector.load %arg4[%c0_6, %c0_7] : memref<256x256xbf16, #tpu.memory_space<vmem>>, vector<256x256xbf16>
    %cst_8 = arith.constant dense<0.000000e+00> : vector<256x128xf32>
    %11 = tpu.matmul %10, %9, %cst_8 {dimension_numbers = #tpu.dot_dimension_numbers<[1], [0], [0], [1], [0, 0, 1, 1], [], []>} : vector<256x256xbf16>, vector<256x128xbf16>, vector<256x128xf32> -> vector<256x128xf32>
    %c0_9 = arith.constant 0 : index
    %c0_10 = arith.constant 0 : index
    %12 = vector.load %arg5[%c0_9, %c0_10] : memref<256x1xf32, #tpu.memory_space<vmem>>, vector<256x1xf32>
    %13 = vector.broadcast %12 : vector<256x1xf32> to vector<256x128xf32>
    %14 = arith.addf %11, %13 : vector<256x128xf32>
    %cst_11 = arith.constant 0.000000e+00 : f32
    %15 = vector.broadcast %cst_11 : f32 to vector<256x128xf32>
    %16 = arith.maximumf %14, %15 : vector<256x128xf32>
    %c0_12 = arith.constant 0 : index
    %c0_13 = arith.constant 0 : index
    %17 = vector.load %arg6[%c0_12, %c0_13] : memref<256x1xf32, #tpu.memory_space<vmem>>, vector<256x1xf32>
    %18 = vector.broadcast %17 : vector<256x1xf32> to vector<256x128xf32>
    %19 = arith.mulf %16, %18 : vector<256x128xf32>
    %cst_14 = arith.constant dense<0.000000e+00> : vector<128xf32>
    %20 = vector.multi_reduction <add>, %19, %cst_14 [0] : vector<256x128xf32> to vector<128xf32>
    %21 = vector.shape_cast %20 : vector<128xf32> to vector<1x128xf32>
    %c0_15 = arith.constant 0 : index
    %c0_16 = arith.constant 0 : index
    %22 = vector.load %arg7[%c0_15, %c0_16] : memref<1x1xf32, #tpu.memory_space<vmem>>, vector<1x1xf32>
    %23 = vector.broadcast %22 : vector<1x1xf32> to vector<1x128xf32>
    %24 = arith.addf %21, %23 : vector<1x128xf32>
    %c0_17 = arith.constant 0 : index
    %c0_18 = arith.constant 0 : index
    %25 = vector.load %arg8[%c0_17, %c0_18] : memref<1x128xf32, #tpu.memory_space<vmem>>, vector<1x128xf32>
    tpu.vector_store %arg8[%c0_17, %c0_18], %24 {strides = array<i32>} : memref<1x128xf32, #tpu.memory_space<vmem>>, vector<1x128xf32>,
    return
  }
  func.func @transform_0(%arg0: i32) -> (i32, i32) {
    %c0_i32 = arith.constant 0 : i32
    %c0_i32_0 = arith.constant 0 : i32
    return %arg0, %c0_i32 : i32, i32
  }
  func.func @transform_1(%arg0: i32) -> (i32, i32) {
    %c0_i32 = arith.constant 0 : i32
    %c0_i32_0 = arith.constant 0 : i32
    %c0_i32_1 = arith.constant 0 : i32
    return %c0_i32, %c0_i32_0 : i32, i32
  }
  func.func @transform_2(%arg0: i32) -> (i32, i32) {
    %c0_i32 = arith.constant 0 : i32
    %c0_i32_0 = arith.constant 0 : i32
    %c0_i32_1 = arith.constant 0 : i32
    return %c0_i32, %c0_i32_0 : i32, i32
  }
  func.func @transform_3(%arg0: i32) -> (i32, i32) {
    %c0_i32 = arith.constant 0 : i32
    %c0_i32_0 = arith.constant 0 : i32
    %c0_i32_1 = arith.constant 0 : i32
    return %c0_i32, %c0_i32_0 : i32, i32
  }
  func.func @transform_4(%arg0: i32) -> (i32, i32) {
    %c0_i32 = arith.constant 0 : i32
    %c0_i32_0 = arith.constant 0 : i32
    %c0_i32_1 = arith.constant 0 : i32
    return %c0_i32, %c0_i32_0 : i32, i32
  }
  func.func @transform_5(%arg0: i32) -> (i32, i32) {
    %c0_i32 = arith.constant 0 : i32
    %c0_i32_0 = arith.constant 0 : i32
    %c0_i32_1 = arith.constant 0 : i32
    return %c0_i32, %c0_i32_0 : i32, i32
  }
  func.func @transform_6(%arg0: i32) -> (i32, i32) {
    %c0_i32 = arith.constant 0 : i32
    %c0_i32_0 = arith.constant 0 : i32
    %c0_i32_1 = arith.constant 0 : i32
    return %c0_i32, %c0_i32_0 : i32, i32
  }
  func.func @transform_7(%arg0: i32) -> (i32, i32) {
    %c0_i32 = arith.constant 0 : i32
    %c0_i32_0 = arith.constant 0 : i32
    return %c0_i32, %arg0 : i32, i32
  }
}

</mosaic_0001>

<llo_original>
// kernel: reward_model_forward.1
$region0: #{reward_model_forward.1}
  #allocation0 [shape = 'u32[]', space=smem, size = 0x4, offset = 0x4, fixed_abs, tag = 'smem constant byte address 0x4 - core index']
  #allocation1 [shape = 'u32[72,128]{1,0:T(1,128)}', space=vmem, size = 0x9000, scoped, tag = 'internal scratch']
  #allocation2 [shape = 'f32[1,1]{1,0:T(1,128)S(1)}', space=vmem, size = 0x200, scoped, tag = 'scoped memory for reward_model_forward.1']
  %s0 = inlined_call_operand.vmem [shape: f32[128,32], index: 0, kind: input, shape index: {}]
  %s1 = inlined_call_operand.vmem [shape: bf16[256,32], index: 1, kind: input, shape index: {}]
  %s2 = inlined_call_operand.vmem [shape: f32[256,1], index: 2, kind: input, shape index: {}]
  %s3 = inlined_call_operand.vmem [shape: bf16[256,256], index: 3, kind: input, shape index: {}]
  %s4 = inlined_call_operand.vmem [shape: f32[256,1], index: 4, kind: input, shape index: {}]
  %s5 = inlined_call_operand.vmem [shape: f32[256,1], index: 5, kind: input, shape index: {}]
  %s6 = inlined_call_operand.<no memory space> [shape: f32[1,1], index: 6, kind: input, shape index: {}]
  %s7 = inlined_call_operand.vmem [shape: f32[1,128], index: 7, kind: output, shape index: {}]
  %s8 = sld [smem:[#allocation0]]
  $region38: #{reward_model_forward.1} parent=0
    _
  %s10 = ssub.s32 1, %s8
  %s11 = scalar_select 0, %s10, %s8
  %v12 = vstv %s6
  %13 = vst [vmem:[#allocation2] sm:$0x1] %v12
  // Predicated region
  $region2: #{reward_model_forward.1} parent=0 // pred_check
    _
  $region3: #{reward_model_forward.1} parent=0 // pred_check_branch
    %15 = sbr.rel (0) target = $region5
  $region4: #{reward_model_forward.1} parent=0 // pred_region
    _
  $region5: #{reward_model_forward.1} parent=0 // pred_fallthru
    _
  // Predicated region
  $region6: #{reward_model_forward.1} parent=0 // pred_check
    _
  $region7: #{reward_model_forward.1} parent=0 // pred_check_branch
    %17 = sbr.rel (0) target = $region9
  $region8: #{reward_model_forward.1} parent=0 // pred_region
    _
  $region9: #{reward_model_forward.1} parent=0 // pred_fallthru
    _
  // Predicated region
  $region10: #{reward_model_forward.1} parent=0 // pred_check
    _
  $region11: #{reward_model_forward.1} parent=0 // pred_check_branch
    %19 = sbr.rel (0) target = $region13
  $region12: #{reward_model_forward.1} parent=0 // pred_region
    _
  $region13: #{reward_model_forward.1} parent=0 // pred_fallthru
    _
  // Predicated region
  $region14: #{reward_model_forward.1} parent=0 // pred_check
    _
  $region15: #{reward_model_forward.1} parent=0 // pred_check_branch
    %21 = sbr.rel (0) target = $region17
  $region16: #{reward_model_forward.1} parent=0 // pred_region
    _
  $region17: #{reward_model_forward.1} parent=0 // pred_fallthru
    _
  // Predicated region
  $region18: #{reward_model_forward.1} parent=0 // pred_check
    _
  $region19: #{reward_model_forward.1} parent=0 // pred_check_branch
    %23 = sbr.rel (0) target = $region21
  $region20: #{reward_model_forward.1} parent=0 // pred_region
    _
  $region21: #{reward_model_forward.1} parent=0 // pred_fallthru
    _
  // Predicated region
  $region22: #{reward_model_forward.1} parent=0 // pred_check
    _
  $region23: #{reward_model_forward.1} parent=0 // pred_check_branch
    %25 = sbr.rel (0) target = $region25
  $region24: #{reward_model_forward.1} parent=0 // pred_region
    _
  $region25: #{reward_model_forward.1} parent=0 // pred_fallthru
    _
  // Predicated region
  $region26: #{reward_model_forward.1} parent=0 // pred_check
    _
  $region27: #{reward_model_forward.1} parent=0 // pred_check_branch
    %27 = sbr.rel (0) target = $region29
  $region28: #{reward_model_forward.1} parent=0 // pred_region
    _
  $region29: #{reward_model_forward.1} parent=0 // pred_fallthru
    _
  %v28 = vld [vmem:[%s0] sm:$0xff]
  %v29 = vld [vmem:[%s0 + $0x8] sm:$0xff]
  %v30 = vld [vmem:[%s0 + $0x10] sm:$0xff]
  %v31 = vld [vmem:[%s0 + $0x18] sm:$0xff]
  %v32 = vld [vmem:[%s0 + $0x20] sm:$0xff]
  %v33 = vld [vmem:[%s0 + $0x28] sm:$0xff]
  %v34 = vld [vmem:[%s0 + $0x30] sm:$0xff]
  %v35 = vld [vmem:[%s0 + $0x38] sm:$0xff]
  %v36 = vld [vmem:[%s0 + $0x40] sm:$0xff]
  %v37 = vld [vmem:[%s0 + $0x48] sm:$0xff]
  %v38 = vld [vmem:[%s0 + $0x50] sm:$0xff]
  %v39 = vld [vmem:[%s0 + $0x58] sm:$0xff]
  %v40 = vld [vmem:[%s0 + $0x60] sm:$0xff]
  %v41 = vld [vmem:[%s0 + $0x68] sm:$0xff]
  %v42 = vld [vmem:[%s0 + $0x70] sm:$0xff]
  %v43 = vld [vmem:[%s0 + $0x78] sm:$0xff]
  %v44 = vpack.c.bf16 %v29, %v28
  %v45 = vpack.c.bf16 %v31, %v30
  %v46 = vpack.c.bf16 %v33, %v32
  %v47 = vpack.c.bf16 %v35, %v34
  %v48 = vpack.c.bf16 %v37, %v36
  %v49 = vpack.c.bf16 %v39, %v38
  %v50 = vpack.c.bf16 %v41, %v40
  %v51 = vpack.c.bf16 %v43, %v42
  %v52 = vld [vmem:[%s1] sm:$0xf]
  %v53 = vld [vmem:[%s1 + $0x4] sm:$0xf]
  %v54 = vld [vmem:[%s1 + $0x8] sm:$0xf]
  %v55 = vld [vmem:[%s1 + $0xc] sm:$0xf]
  %v56 = vld [vmem:[%s1 + $0x10] sm:$0xf]
  %v57 = vld [vmem:[%s1 + $0x14] sm:$0xf]
  %v58 = vld [vmem:[%s1 + $0x18] sm:$0xf]
  %v59 = vld [vmem:[%s1 + $0x1c] sm:$0xf]
  %v60 = vld [vmem:[%s1 + $0x20] sm:$0xf]
  %v61 = vld [vmem:[%s1 + $0x24] sm:$0xf]
  %v62 = vld [vmem:[%s1 + $0x28] sm:$0xf]
  %v63 = vld [vmem:[%s1 + $0x2c] sm:$0xf]
  %v64 = vld [vmem:[%s1 + $0x30] sm:$0xf]
  %v65 = vld [vmem:[%s1 + $0x34] sm:$0xf]
  %v66 = vld [vmem:[%s1 + $0x38] sm:$0xf]
  %v67 = vld [vmem:[%s1 + $0x3c] sm:$0xf]
  %v68 = vld [vmem:[%s1 + $0x40] sm:$0xf]
  %v69 = vld [vmem:[%s1 + $0x44] sm:$0xf]
  %v70 = vld [vmem:[%s1 + $0x48] sm:$0xf]
  %v71 = vld [vmem:[%s1 + $0x4c] sm:$0xf]
  %v72 = vld [vmem:[%s1 + $0x50] sm:$0xf]
  %v73 = vld [vmem:[%s1 + $0x54] sm:$0xf]
  %v74 = vld [vmem:[%s1 + $0x58] sm:$0xf]
  %v75 = vld [vmem:[%s1 + $0x5c] sm:$0xf]
  %v76 = vld [vmem:[%s1 + $0x60] sm:$0xf]
  %v77 = vld [vmem:[%s1 + $0x64] sm:$0xf]
  %v78 = vld [vmem:[%s1 + $0x68] sm:$0xf]
  %v79 = vld [vmem:[%s1 + $0x6c] sm:$0xf]
  %v80 = vld [vmem:[%s1 + $0x70] sm:$0xf]
  %v81 = vld [vmem:[%s1 + $0x74] sm:$0xf]
  %v82 = vld [vmem:[%s1 + $0x78] sm:$0xf]
  %v83 = vld [vmem:[%s1 + $0x7c] sm:$0xf]
  %v84 = vld [vmem:[%s2] sm:$0xff]
  %v85 = vld [vmem:[%s2 + $0x8] sm:$0xff]
  %v86 = vld [vmem:[%s2 + $0x10] sm:$0xff]
  %v87 = vld [vmem:[%s2 + $0x18] sm:$0xff]
  %v88 = vld [vmem:[%s2 + $0x20] sm:$0xff]
  %v89 = vld [vmem:[%s2 + $0x28] sm:$0xff]
  %v90 = vld [vmem:[%s2 + $0x30] sm:$0xff]
  %v91 = vld [vmem:[%s2 + $0x38] sm:$0xff]
  %v92 = vld [vmem:[%s2 + $0x40] sm:$0xff]
  %v93 = vld [vmem:[%s2 + $0x48] sm:$0xff]
  %v94 = vld [vmem:[%s2 + $0x50] sm:$0xff]
  %v95 = vld [vmem:[%s2 + $0x58] sm:$0xff]
  %v96 = vld [vmem:[%s2 + $0x60] sm:$0xff]
  %v97 = vld [vmem:[%s2 + $0x68] sm:$0xff]
  %v98 = vld [vmem:[%s2 + $0x70] sm:$0xff]
  %v99 = vld [vmem:[%s2 + $0x78] sm:$0xff]
  %v100 = vld [vmem:[%s2 + $0x80] sm:$0xff]
  %v101 = vld [vmem:[%s2 + $0x88] sm:$0xff]
  %v102 = vld [vmem:[%s2 + $0x90] sm:$0xff]
  %v103 = vld [vmem:[%s2 + $0x98] sm:$0xff]
  %v104 = vld [vmem:[%s2 + $0xa0] sm:$0xff]
  %v105 = vld [vmem:[%s2 + $0xa8] sm:$0xff]
  %v106 = vld [vmem:[%s2 + $0xb0] sm:$0xff]
  %v107 = vld [vmem:[%s2 + $0xb8] sm:$0xff]
  %v108 = vld [vmem:[%s2 + $0xc0] sm:$0xff]
  %v109 = vld [vmem:[%s2 + $0xc8] sm:$0xff]
  %v110 = vld [vmem:[%s2 + $0xd0] sm:$0xff]
  %v111 = vld [vmem:[%s2 + $0xd8] sm:$0xff]
  %v112 = vld [vmem:[%s2 + $0xe0] sm:$0xff]
  %v113 = vld [vmem:[%s2 + $0xe8] sm:$0xff]
  %v114 = vld [vmem:[%s2 + $0xf0] sm:$0xff]
  %v115 = vld [vmem:[%s2 + $0xf8] sm:$0xff]
  %117 = vset.pattern.permute.xlu0 0
  %118 = vperm.xlu0 %117, %v84
  %v119 = vpop.permute.xlu0 %118
  %122 = vset.pattern.permute.xlu0 0
  %123 = vperm.xlu0 %122, %v85
  %v124 = vpop.permute.xlu0 %123
  %127 = vset.pattern.permute.xlu0 0
  %128 = vperm.xlu0 %127, %v86
  %v129 = vpop.permute.xlu0 %128
  %132 = vset.pattern.permute.xlu0 0
  %133 = vperm.xlu0 %132, %v87
  %v134 = vpop.permute.xlu0 %133
  %137 = vset.pattern.permute.xlu0 0
  %138 = vperm.xlu0 %137, %v88
  %v139 = vpop.permute.xlu0 %138
  %142 = vset.pattern.permute.xlu0 0
  %143 = vperm.xlu0 %142, %v89
  %v144 = vpop.permute.xlu0 %143
  %147 = vset.pattern.permute.xlu0 0
  %148 = vperm.xlu0 %147, %v90
  %v149 = vpop.permute.xlu0 %148
  %152 = vset.pattern.permute.xlu0 0
  %153 = vperm.xlu0 %152, %v91
  %v154 = vpop.permute.xlu0 %153
  %157 = vset.pattern.permute.xlu0 0
  %158 = vperm.xlu0 %157, %v92
  %v159 = vpop.permute.xlu0 %158
  %162 = vset.pattern.permute.xlu0 0
  %163 = vperm.xlu0 %162, %v93
  %v164 = vpop.permute.xlu0 %163
  %167 = vset.pattern.permute.xlu0 0
  %168 = vperm.xlu0 %167, %v94
  %v169 = vpop.permute.xlu0 %168
  %172 = vset.pattern.permute.xlu0 0
  %173 = vperm.xlu0 %172, %v95
  %v174 = vpop.permute.xlu0 %173
  %177 = vset.pattern.permute.xlu0 0
  %178 = vperm.xlu0 %177, %v96
  %v179 = vpop.permute.xlu0 %178
  %182 = vset.pattern.permute.xlu0 0
  %183 = vperm.xlu0 %182, %v97
  %v184 = vpop.permute.xlu0 %183
  %187 = vset.pattern.permute.xlu0 0
  %188 = vperm.xlu0 %187, %v98
  %v189 = vpop.permute.xlu0 %188
  %192 = vset.pattern.permute.xlu0 0
  %193 = vperm.xlu0 %192, %v99
  %v194 = vpop.permute.xlu0 %193
  %197 = vset.pattern.permute.xlu0 0
  %198 = vperm.xlu0 %197, %v100
  %v199 = vpop.permute.xlu0 %198
  %202 = vset.pattern.permute.xlu0 0
  %203 = vperm.xlu0 %202, %v101
  %v204 = vpop.permute.xlu0 %203
  %207 = vset.pattern.permute.xlu0 0
  %208 = vperm.xlu0 %207, %v102
  %v209 = vpop.permute.xlu0 %208
  %212 = vset.pattern.permute.xlu0 0
  %213 = vperm.xlu0 %212, %v103
  %v214 = vpop.permute.xlu0 %213
  %217 = vset.pattern.permute.xlu0 0
  %218 = vperm.xlu0 %217, %v104
  %v219 = vpop.permute.xlu0 %218
  %222 = vset.pattern.permute.xlu0 0
  %223 = vperm.xlu0 %222, %v105
  %v224 = vpop.permute.xlu0 %223
  %227 = vset.pattern.permute.xlu0 0
  %228 = vperm.xlu0 %227, %v106
  %v229 = vpop.permute.xlu0 %228
  %232 = vset.pattern.permute.xlu0 0
  %233 = vperm.xlu0 %232, %v107
  %v234 = vpop.permute.xlu0 %233
  %237 = vset.pattern.permute.xlu0 0
  %238 = vperm.xlu0 %237, %v108
  %v239 = vpop.permute.xlu0 %238
  %242 = vset.pattern.permute.xlu0 0
  %243 = vperm.xlu0 %242, %v109
  %v244 = vpop.permute.xlu0 %243
  %247 = vset.pattern.permute.xlu0 0
  %248 = vperm.xlu0 %247, %v110
  %v249 = vpop.permute.xlu0 %248
  %252 = vset.pattern.permute.xlu0 0
  %253 = vperm.xlu0 %252, %v111
  %v254 = vpop.permute.xlu0 %253
  %257 = vset.pattern.permute.xlu0 0
  %258 = vperm.xlu0 %257, %v112
  %v259 = vpop.permute.xlu0 %258
  %262 = vset.pattern.permute.xlu0 0
  %263 = vperm.xlu0 %262, %v113
  %v264 = vpop.permute.xlu0 %263
  %267 = vset.pattern.permute.xlu0 0
  %268 = vperm.xlu0 %267, %v114
  %v269 = vpop.permute.xlu0 %268
  %272 = vset.pattern.permute.xlu0 0
  %273 = vperm.xlu0 %272, %v115
  %v274 = vpop.permute.xlu0 %273
  %v308 = vunpack.c.l.b16 %v52
  %v309 = vunpack.c.l.b16 %v53
  %v310 = vunpack.c.l.b16 %v54
  %v311 = vunpack.c.l.b16 %v55
  %v312 = vunpack.c.l.b16 %v56
  %v313 = vunpack.c.l.b16 %v57
  %v314 = vunpack.c.l.b16 %v58
  %v315 = vunpack.c.l.b16 %v59
  %v316 = vunpack.c.l.b16 %v60
  %v317 = vunpack.c.l.b16 %v61
  %v318 = vunpack.c.l.b16 %v62
  %v319 = vunpack.c.l.b16 %v63
  %v320 = vunpack.c.l.b16 %v64
  %v321 = vunpack.c.l.b16 %v65
  %v322 = vunpack.c.l.b16 %v66
  %v323 = vunpack.c.l.b16 %v67
  %v324 = vunpack.c.l.b16 %v68
  %v325 = vunpack.c.l.b16 %v69
  %v326 = vunpack.c.l.b16 %v70
  %v327 = vunpack.c.l.b16 %v71
  %v328 = vunpack.c.l.b16 %v72
  %v329 = vunpack.c.l.b16 %v73
  %v330 = vunpack.c.l.b16 %v74
  %v331 = vunpack.c.l.b16 %v75
  %v332 = vunpack.c.l.b16 %v76
  %v333 = vunpack.c.l.b16 %v77
  %v334 = vunpack.c.l.b16 %v78
  %v335 = vunpack.c.l.b16 %v79
  %v336 = vunpack.c.l.b16 %v80
  %v337 = vunpack.c.l.b16 %v81
  %v338 = vunpack.c.l.b16 %v82
  %v339 = vunpack.c.l.b16 %v83
  %v340 = vpack.c.b16 %v309, %v308
  %v341 = vpack.c.b16 %v311, %v310
  %v342 = vpack.c.b16 %v313, %v312
  %v343 = vpack.c.b16 %v315, %v314
  %v344 = vpack.c.b16 %v317, %v316
  %v345 = vpack.c.b16 %v319, %v318
  %v346 = vpack.c.b16 %v321, %v320
  %v347 = vpack.c.b16 %v323, %v322
  %v348 = vpack.c.b16 %v325, %v324
  %v349 = vpack.c.b16 %v327, %v326
  %v350 = vpack.c.b16 %v329, %v328
  %v351 = vpack.c.b16 %v331, %v330
  %v352 = vpack.c.b16 %v333, %v332
  %v353 = vpack.c.b16 %v335, %v334
  %v354 = vpack.c.b16 %v337, %v336
  %v355 = vpack.c.b16 %v339, %v338
  %vm356 = vcmask 261120
  %v358 = vsel %vm356, %v340, 0
  %v361 = vsel %vm356, %v341, 0
  %v364 = vsel %vm356, %v342, 0
  %v367 = vsel %vm356, %v343, 0
  %v370 = vsel %vm356, %v344, 0
  %v373 = vsel %vm356, %v345, 0
  %v376 = vsel %vm356, %v346, 0
  %v379 = vsel %vm356, %v347, 0
  %v382 = vsel %vm356, %v348, 0
  %v385 = vsel %vm356, %v349, 0
  %v388 = vsel %vm356, %v350, 0
  %v391 = vsel %vm356, %v351, 0
  %v394 = vsel %vm356, %v352, 0
  %v397 = vsel %vm356, %v353, 0
  %v400 = vsel %vm356, %v354, 0
  %v403 = vsel %vm356, %v355, 0
  %v406 = vsel %vm356, %v44, 0
  %v409 = vsel %vm356, %v45, 0
  %v412 = vsel %vm356, %v46, 0
  %v415 = vsel %vm356, %v47, 0
  %v418 = vsel %vm356, %v48, 0
  %v421 = vsel %vm356, %v49, 0
  %v424 = vsel %vm356, %v50, 0
  %v427 = vsel %vm356, %v51, 0
  %429 = vmatpush.bf16.xpose.msra.mxu0 %v427
  %430 = vmatpush.bf16.xpose.msra.mxu0 %v424
  %431 = vmatpush.bf16.xpose.msra.mxu0 %v421
  %432 = vmatpush.bf16.xpose.msra.mxu0 %v418
  %433 = vmatpush.bf16.xpose.msra.mxu0 %v415
  %434 = vmatpush.bf16.xpose.msra.mxu0 %v412
  %435 = vmatpush.bf16.xpose.msra.mxu0 %v409
  %436 = vmatpush.bf16.xpose.msra.mxu0 %v406
  %437 = vmatmul.bf16.gmra.mxu0 %v358
  %v438 = vpop.f32.mrf.mxu0
  %v439 = vadd.f32 %v119, %v438
  %v440 = vpop.f32.mrf.mxu0
  %v441 = vadd.f32 %v124, %v440
  %442 = vmatmul.bf16.gmra.mxu0 %v361
  %v443 = vpop.f32.mrf.mxu0
  %v444 = vadd.f32 %v129, %v443
  %v445 = vpop.f32.mrf.mxu0
  %v446 = vadd.f32 %v134, %v445
  %447 = vmatmul.bf16.gmra.mxu0 %v364
  %v448 = vpop.f32.mrf.mxu0
  %v449 = vadd.f32 %v139, %v448
  %v450 = vpop.f32.mrf.mxu0
  %v451 = vadd.f32 %v144, %v450
  %452 = vmatmul.bf16.gmra.mxu0 %v367
  %v453 = vpop.f32.mrf.mxu0
  %v454 = vadd.f32 %v149, %v453
  %v455 = vpop.f32.mrf.mxu0
  %v456 = vadd.f32 %v154, %v455
  %457 = vmatmul.bf16.gmra.mxu0 %v370
  %v458 = vpop.f32.mrf.mxu0
  %v459 = vadd.f32 %v159, %v458
  %v460 = vpop.f32.mrf.mxu0
  %v461 = vadd.f32 %v164, %v460
  %462 = vmatmul.bf16.gmra.mxu0 %v373
  %v463 = vpop.f32.mrf.mxu0
  %v464 = vadd.f32 %v169, %v463
  %v465 = vpop.f32.mrf.mxu0
  %v466 = vadd.f32 %v174, %v465
  %467 = vmatmul.bf16.gmra.mxu0 %v376
  %v468 = vpop.f32.mrf.mxu0
  %v469 = vadd.f32 %v179, %v468
  %v470 = vpop.f32.mrf.mxu0
  %v471 = vadd.f32 %v184, %v470
  %472 = vmatmul.bf16.gmra.mxu0 %v379
  %v473 = vpop.f32.mrf.mxu0
  %v474 = vadd.f32 %v189, %v473
  %v475 = vpop.f32.mrf.mxu0
  %v476 = vadd.f32 %v194, %v475
  %477 = vmatmul.bf16.gmra.mxu0 %v382
  %v478 = vpop.f32.mrf.mxu0
  %v479 = vadd.f32 %v199, %v478
  %v480 = vpop.f32.mrf.mxu0
  %v481 = vadd.f32 %v204, %v480
  %482 = vmatmul.bf16.gmra.mxu0 %v385
  %v483 = vpop.f32.mrf.mxu0
  %v484 = vadd.f32 %v209, %v483
  %v485 = vpop.f32.mrf.mxu0
  %v486 = vadd.f32 %v214, %v485
  %487 = vmatmul.bf16.gmra.mxu0 %v388
  %v488 = vpop.f32.mrf.mxu0
  %v489 = vadd.f32 %v219, %v488
  %v490 = vpop.f32.mrf.mxu0
  %v491 = vadd.f32 %v224, %v490
  %492 = vmatmul.bf16.gmra.mxu0 %v391
  %v493 = vpop.f32.mrf.mxu0
  %v494 = vadd.f32 %v229, %v493
  %v495 = vpop.f32.mrf.mxu0
  %v496 = vadd.f32 %v234, %v495
  %497 = vmatmul.bf16.gmra.mxu0 %v394
  %v498 = vpop.f32.mrf.mxu0
  %v499 = vadd.f32 %v239, %v498
  %v500 = vpop.f32.mrf.mxu0
  %v501 = vadd.f32 %v244, %v500
  %502 = vmatmul.bf16.gmra.mxu0 %v397
  %v503 = vpop.f32.mrf.mxu0
  %v504 = vadd.f32 %v249, %v503
  %v505 = vpop.f32.mrf.mxu0
  %v506 = vadd.f32 %v254, %v505
  %507 = vmatmul.bf16.gmra.mxu0 %v400
  %v508 = vpop.f32.mrf.mxu0
  %v509 = vadd.f32 %v259, %v508
  %v510 = vpop.f32.mrf.mxu0
  %v511 = vadd.f32 %v264, %v510
  %512 = vmatmul.bf16.gmra.mxu0 %v403
  %v513 = vpop.f32.mrf.mxu0
  %v514 = vadd.f32 %v269, %v513
  %v515 = vpop.f32.mrf.mxu0
  %v516 = vadd.f32 %v274, %v515
  %517 = vdwg.mxu0
  %v518 = vpack.c.bf16 %v439, %v439
  %v519 = vpack.c.bf16 %v441, %v441
  %v520 = vpack.c.bf16 %v444, %v444
  %v521 = vpack.c.bf16 %v446, %v446
  %v522 = vpack.c.bf16 %v449, %v449
  %v523 = vpack.c.bf16 %v451, %v451
  %v524 = vpack.c.bf16 %v454, %v454
  %v525 = vpack.c.bf16 %v456, %v456
  %v526 = vpack.c.bf16 %v459, %v459
  %v527 = vpack.c.bf16 %v461, %v461
  %v528 = vpack.c.bf16 %v464, %v464
  %v529 = vpack.c.bf16 %v466, %v466
  %v530 = vpack.c.bf16 %v469, %v469
  %v531 = vpack.c.bf16 %v471, %v471
  %v532 = vpack.c.bf16 %v474, %v474
  %v533 = vpack.c.bf16 %v476, %v476
  %v534 = vpack.c.bf16 %v479, %v479
  %v535 = vpack.c.bf16 %v481, %v481
  %v536 = vpack.c.bf16 %v484, %v484
  %v537 = vpack.c.bf16 %v486, %v486
  %v538 = vpack.c.bf16 %v489, %v489
  %v539 = vpack.c.bf16 %v491, %v491
  %v540 = vpack.c.bf16 %v494, %v494
  %v541 = vpack.c.bf16 %v496, %v496
  %v542 = vpack.c.bf16 %v499, %v499
  %v543 = vpack.c.bf16 %v501, %v501
  %v544 = vpack.c.bf16 %v504, %v504
  %v545 = vpack.c.bf16 %v506, %v506
  %v546 = vpack.c.bf16 %v509, %v509
  %v547 = vpack.c.bf16 %v511, %v511
  %v548 = vpack.c.bf16 %v514, %v514
  %v549 = vpack.c.bf16 %v516, %v516
  %v550 = vunpack.c.l.bf16 %v518
  %v551 = vunpack.c.l.bf16 %v519
  %v552 = vunpack.c.l.bf16 %v520
  %v553 = vunpack.c.l.bf16 %v521
  %v554 = vunpack.c.l.bf16 %v522
  %v555 = vunpack.c.l.bf16 %v523
  %v556 = vunpack.c.l.bf16 %v524
  %v557 = vunpack.c.l.bf16 %v525
  %v558 = vunpack.c.l.bf16 %v526
  %v559 = vunpack.c.l.bf16 %v527
  %v560 = vunpack.c.l.bf16 %v528
  %v561 = vunpack.c.l.bf16 %v529
  %v562 = vunpack.c.l.bf16 %v530
  %v563 = vunpack.c.l.bf16 %v531
  %v564 = vunpack.c.l.bf16 %v532
  %v565 = vunpack.c.l.bf16 %v533
  %v566 = vunpack.c.l.bf16 %v534
  %v567 = vunpack.c.l.bf16 %v535
  %v568 = vunpack.c.l.bf16 %v536
  %v569 = vunpack.c.l.bf16 %v537
  %v570 = vunpack.c.l.bf16 %v538
  %v571 = vunpack.c.l.bf16 %v539
  %v572 = vunpack.c.l.bf16 %v540
  %v573 = vunpack.c.l.bf16 %v541
  %v574 = vunpack.c.l.bf16 %v542
  %v575 = vunpack.c.l.bf16 %v543
  %v576 = vunpack.c.l.bf16 %v544
  %v577 = vunpack.c.l.bf16 %v545
  %v578 = vunpack.c.l.bf16 %v546
  %v579 = vunpack.c.l.bf16 %v547
  %v580 = vunpack.c.l.bf16 %v548
  %v581 = vunpack.c.l.bf16 %v549
  %v582 = vmax.f32 %v550, 0.0
  %v583 = vmax.f32 %v551, 0.0
  %v584 = vmax.f32 %v552, 0.0
  %v585 = vmax.f32 %v553, 0.0
  %v586 = vmax.f32 %v554, 0.0
  %v587 = vmax.f32 %v555, 0.0
  %v588 = vmax.f32 %v556, 0.0
  %v589 = vmax.f32 %v557, 0.0
  %v590 = vmax.f32 %v558, 0.0
  %v591 = vmax.f32 %v559, 0.0
  %v592 = vmax.f32 %v560, 0.0
  %v593 = vmax.f32 %v561, 0.0
  %v594 = vmax.f32 %v562, 0.0
  %v595 = vmax.f32 %v563, 0.0
  %v596 = vmax.f32 %v564, 0.0
  %v597 = vmax.f32 %v565, 0.0
  %v598 = vmax.f32 %v566, 0.0
  %v599 = vmax.f32 %v567, 0.0
  %v600 = vmax.f32 %v568, 0.0
  %v601 = vmax.f32 %v569, 0.0
  %v602 = vmax.f32 %v570, 0.0
  %v603 = vmax.f32 %v571, 0.0
  %v604 = vmax.f32 %v572, 0.0
  %v605 = vmax.f32 %v573, 0.0
  %v606 = vmax.f32 %v574, 0.0
  %v607 = vmax.f32 %v575, 0.0
  %v608 = vmax.f32 %v576, 0.0
  %v609 = vmax.f32 %v577, 0.0
  %v610 = vmax.f32 %v578, 0.0
  %v611 = vmax.f32 %v579, 0.0
  %v612 = vmax.f32 %v580, 0.0
  %v613 = vmax.f32 %v581, 0.0
  %v614 = vpack.c.bf16 %v583, %v582
  %v615 = vpack.c.bf16 %v585, %v584
  %v616 = vpack.c.bf16 %v587, %v586
  %v617 = vpack.c.bf16 %v589, %v588
  %v618 = vpack.c.bf16 %v591, %v590
  %v619 = vpack.c.bf16 %v593, %v592
  %v620 = vpack.c.bf16 %v595, %v594
  %v621 = vpack.c.bf16 %v597, %v596
  %v622 = vpack.c.bf16 %v599, %v598
  %v623 = vpack.c.bf16 %v601, %v600
  %v624 = vpack.c.bf16 %v603, %v602
  %v625 = vpack.c.bf16 %v605, %v604
  %v626 = vpack.c.bf16 %v607, %v606
  %v627 = vpack.c.bf16 %v609, %v608
  %v628 = vpack.c.bf16 %v611, %v610
  %v629 = vpack.c.bf16 %v613, %v612
  %v630 = vld [vmem:[%s3] sm:$0xff]
  %v631 = vld [vmem:[%s3 + $0x8] sm:$0xff]
  %v632 = vld [vmem:[%s3 + $0x10] sm:$0xff]
  %v633 = vld [vmem:[%s3 + $0x18] sm:$0xff]
  %v634 = vld [vmem:[%s3 + $0x20] sm:$0xff]
  %v635 = vld [vmem:[%s3 + $0x28] sm:$0xff]
  %v636 = vld [vmem:[%s3 + $0x30] sm:$0xff]
  %v637 = vld [vmem:[%s3 + $0x38] sm:$0xff]
  %v638 = vld [vmem:[%s3 + $0x40] sm:$0xff]
  %v639 = vld [vmem:[%s3 + $0x48] sm:$0xff]
  %v640 = vld [vmem:[%s3 + $0x50] sm:$0xff]
  %v641 = vld [vmem:[%s3 + $0x58] sm:$0xff]
  %v642 = vld [vmem:[%s3 + $0x60] sm:$0xff]
  %v643 = vld [vmem:[%s3 + $0x68] sm:$0xff]
  %v644 = vld [vmem:[%s3 + $0x70] sm:$0xff]
  %v645 = vld [vmem:[%s3 + $0x78] sm:$0xff]
  %v646 = vld [vmem:[%s3 + $0x80] sm:$0xff]
  %v647 = vld [vmem:[%s3 + $0x88] sm:$0xff]
  %v648 = vld [vmem:[%s3 + $0x90] sm:$0xff]
  %v649 = vld [vmem:[%s3 + $0x98] sm:$0xff]
  %v650 = vld [vmem:[%s3 + $0xa0] sm:$0xff]
  %v651 = vld [vmem:[%s3 + $0xa8] sm:$0xff]
  %v652 = vld [vmem:[%s3 + $0xb0] sm:$0xff]
  %v653 = vld [vmem:[%s3 + $0xb8] sm:$0xff]
  %v654 = vld [vmem:[%s3 + $0xc0] sm:$0xff]
  %v655 = vld [vmem:[%s3 + $0xc8] sm:$0xff]
  %v656 = vld [vmem:[%s3 + $0xd0] sm:$0xff]
  %v657 = vld [vmem:[%s3 + $0xd8] sm:$0xff]
  %v658 = vld [vmem:[%s3 + $0xe0] sm:$0xff]
  %v659 = vld [vmem:[%s3 + $0xe8] sm:$0xff]
  %v660 = vld [vmem:[%s3 + $0xf0] sm:$0xff]
  %v661 = vld [vmem:[%s3 + $0xf8] sm:$0xff]
  %v662 = vld [vmem:[%s4] sm:$0xff]
  %v663 = vld [vmem:[%s4 + $0x8] sm:$0xff]
  %v664 = vld [vmem:[%s4 + $0x10] sm:$0xff]
  %v665 = vld [vmem:[%s4 + $0x18] sm:$0xff]
  %v666 = vld [vmem:[%s4 + $0x20] sm:$0xff]
  %v667 = vld [vmem:[%s4 + $0x28] sm:$0xff]
  %v668 = vld [vmem:[%s4 + $0x30] sm:$0xff]
  %v669 = vld [vmem:[%s4 + $0x38] sm:$0xff]
  %v670 = vld [vmem:[%s4 + $0x40] sm:$0xff]
  %v671 = vld [vmem:[%s4 + $0x48] sm:$0xff]
  %v672 = vld [vmem:[%s4 + $0x50] sm:$0xff]
  %v673 = vld [vmem:[%s4 + $0x58] sm:$0xff]
  %v674 = vld [vmem:[%s4 + $0x60] sm:$0xff]
  %v675 = vld [vmem:[%s4 + $0x68] sm:$0xff]
  %v676 = vld [vmem:[%s4 + $0x70] sm:$0xff]
  %v677 = vld [vmem:[%s4 + $0x78] sm:$0xff]
  %v678 = vld [vmem:[%s4 + $0x80] sm:$0xff]
  %v679 = vld [vmem:[%s4 + $0x88] sm:$0xff]
  %v680 = vld [vmem:[%s4 + $0x90] sm:$0xff]
  %v681 = vld [vmem:[%s4 + $0x98] sm:$0xff]
  %v682 = vld [vmem:[%s4 + $0xa0] sm:$0xff]
  %v683 = vld [vmem:[%s4 + $0xa8] sm:$0xff]
  %v684 = vld [vmem:[%s4 + $0xb0] sm:$0xff]
  %v685 = vld [vmem:[%s4 + $0xb8] sm:$0xff]
  %v686 = vld [vmem:[%s4 + $0xc0] sm:$0xff]
  %v687 = vld [vmem:[%s4 + $0xc8] sm:$0xff]
  %v688 = vld [vmem:[%s4 + $0xd0] sm:$0xff]
  %v689 = vld [vmem:[%s4 + $0xd8] sm:$0xff]
  %v690 = vld [vmem:[%s4 + $0xe0] sm:$0xff]
  %v691 = vld [vmem:[%s4 + $0xe8] sm:$0xff]
  %v692 = vld [vmem:[%s4 + $0xf0] sm:$0xff]
  %v693 = vld [vmem:[%s4 + $0xf8] sm:$0xff]
  %695 = vset.pattern.permute.xlu0 0
  %696 = vperm.xlu0 %695, %v662
  %v697 = vpop.permute.xlu0 %696
  %700 = vset.pattern.permute.xlu0 0
  %701 = vperm.xlu0 %700, %v663
  %v702 = vpop.permute.xlu0 %701
  %705 = vset.pattern.permute.xlu0 0
  %706 = vperm.xlu0 %705, %v664
  %v707 = vpop.permute.xlu0 %706
  %710 = vset.pattern.permute.xlu0 0
  %711 = vperm.xlu0 %710, %v665
  %v712 = vpop.permute.xlu0 %711
  %715 = vset.pattern.permute.xlu0 0
  %716 = vperm.xlu0 %715, %v666
  %v717 = vpop.permute.xlu0 %716
  %720 = vset.pattern.permute.xlu0 0
  %721 = vperm.xlu0 %720, %v667
  %v722 = vpop.permute.xlu0 %721
  %725 = vset.pattern.permute.xlu0 0
  %726 = vperm.xlu0 %725, %v668
  %v727 = vpop.permute.xlu0 %726
  %730 = vset.pattern.permute.xlu0 0
  %731 = vperm.xlu0 %730, %v669
  %v732 = vpop.permute.xlu0 %731
  %735 = vset.pattern.permute.xlu0 0
  %736 = vperm.xlu0 %735, %v670
  %v737 = vpop.permute.xlu0 %736
  %740 = vset.pattern.permute.xlu0 0
  %741 = vperm.xlu0 %740, %v671
  %v742 = vpop.permute.xlu0 %741
  %745 = vset.pattern.permute.xlu0 0
  %746 = vperm.xlu0 %745, %v672
  %v747 = vpop.permute.xlu0 %746
  %750 = vset.pattern.permute.xlu0 0
  %751 = vperm.xlu0 %750, %v673
  %v752 = vpop.permute.xlu0 %751
  %755 = vset.pattern.permute.xlu0 0
  %756 = vperm.xlu0 %755, %v674
  %v757 = vpop.permute.xlu0 %756
  %760 = vset.pattern.permute.xlu0 0
  %761 = vperm.xlu0 %760, %v675
  %v762 = vpop.permute.xlu0 %761
  %765 = vset.pattern.permute.xlu0 0
  %766 = vperm.xlu0 %765, %v676
  %v767 = vpop.permute.xlu0 %766
  %770 = vset.pattern.permute.xlu0 0
  %771 = vperm.xlu0 %770, %v677
  %v772 = vpop.permute.xlu0 %771
  %775 = vset.pattern.permute.xlu0 0
  %776 = vperm.xlu0 %775, %v678
  %v777 = vpop.permute.xlu0 %776
  %780 = vset.pattern.permute.xlu0 0
  %781 = vperm.xlu0 %780, %v679
  %v782 = vpop.permute.xlu0 %781
  %785 = vset.pattern.permute.xlu0 0
  %786 = vperm.xlu0 %785, %v680
  %v787 = vpop.permute.xlu0 %786
  %790 = vset.pattern.permute.xlu0 0
  %791 = vperm.xlu0 %790, %v681
  %v792 = vpop.permute.xlu0 %791
  %795 = vset.pattern.permute.xlu0 0
  %796 = vperm.xlu0 %795, %v682
  %v797 = vpop.permute.xlu0 %796
  %800 = vset.pattern.permute.xlu0 0
  %801 = vperm.xlu0 %800, %v683
  %v802 = vpop.permute.xlu0 %801
  %805 = vset.pattern.permute.xlu0 0
  %806 = vperm.xlu0 %805, %v684
  %v807 = vpop.permute.xlu0 %806
  %810 = vset.pattern.permute.xlu0 0
  %811 = vperm.xlu0 %810, %v685
  %v812 = vpop.permute.xlu0 %811
  %815 = vset.pattern.permute.xlu0 0
  %816 = vperm.xlu0 %815, %v686
  %v817 = vpop.permute.xlu0 %816
  %820 = vset.pattern.permute.xlu0 0
  %821 = vperm.xlu0 %820, %v687
  %v822 = vpop.permute.xlu0 %821
  %825 = vset.pattern.permute.xlu0 0
  %826 = vperm.xlu0 %825, %v688
  %v827 = vpop.permute.xlu0 %826
  %830 = vset.pattern.permute.xlu0 0
  %831 = vperm.xlu0 %830, %v689
  %v832 = vpop.permute.xlu0 %831
  %835 = vset.pattern.permute.xlu0 0
  %836 = vperm.xlu0 %835, %v690
  %v837 = vpop.permute.xlu0 %836
  %840 = vset.pattern.permute.xlu0 0
  %841 = vperm.xlu0 %840, %v691
  %v842 = vpop.permute.xlu0 %841
  %845 = vset.pattern.permute.xlu0 0
  %846 = vperm.xlu0 %845, %v692
  %v847 = vpop.permute.xlu0 %846
  %850 = vset.pattern.permute.xlu0 0
  %851 = vperm.xlu0 %850, %v693
  %v852 = vpop.permute.xlu0 %851
  %v886 = vunpack.c.l.b16 %v630
  %v887 = vunpack.c.h.b16 %v630
  %v888 = vunpack.c.l.b16 %v631
  %v889 = vunpack.c.h.b16 %v631
  %v890 = vunpack.c.l.b16 %v632
  %v891 = vunpack.c.h.b16 %v632
  %v892 = vunpack.c.l.b16 %v633
  %v893 = vunpack.c.h.b16 %v633
  %v894 = vunpack.c.l.b16 %v634
  %v895 = vunpack.c.h.b16 %v634
  %v896 = vunpack.c.l.b16 %v635
  %v897 = vunpack.c.h.b16 %v635
  %v898 = vunpack.c.l.b16 %v636
  %v899 = vunpack.c.h.b16 %v636
  %v900 = vunpack.c.l.b16 %v637
  %v901 = vunpack.c.h.b16 %v637
  %v902 = vunpack.c.l.b16 %v638
  %v903 = vunpack.c.h.b16 %v638
  %v904 = vunpack.c.l.b16 %v639
  %v905 = vunpack.c.h.b16 %v639
  %v906 = vunpack.c.l.b16 %v640
  %v907 = vunpack.c.h.b16 %v640
  %v908 = vunpack.c.l.b16 %v641
  %v909 = vunpack.c.h.b16 %v641
  %v910 = vunpack.c.l.b16 %v642
  %v911 = vunpack.c.h.b16 %v642
  %v912 = vunpack.c.l.b16 %v643
  %v913 = vunpack.c.h.b16 %v643
  %v914 = vunpack.c.l.b16 %v644
  %v915 = vunpack.c.h.b16 %v644
  %v916 = vunpack.c.l.b16 %v645
  %v917 = vunpack.c.h.b16 %v645
  %v918 = vunpack.c.l.b16 %v646
  %v919 = vunpack.c.h.b16 %v646
  %v920 = vunpack.c.l.b16 %v647
  %v921 = vunpack.c.h.b16 %v647
  %v922 = vunpack.c.l.b16 %v648
  %v923 = vunpack.c.h.b16 %v648
  %v924 = vunpack.c.l.b16 %v649
  %v925 = vunpack.c.h.b16 %v649
  %v926 = vunpack.c.l.b16 %v650
  %v927 = vunpack.c.h.b16 %v650
  %v928 = vunpack.c.l.b16 %v651
  %v929 = vunpack.c.h.b16 %v651
  %v930 = vunpack.c.l.b16 %v652
  %v931 = vunpack.c.h.b16 %v652
  %v932 = vunpack.c.l.b16 %v653
  %v933 = vunpack.c.h.b16 %v653
  %v934 = vunpack.c.l.b16 %v654
  %v935 = vunpack.c.h.b16 %v654
  %v936 = vunpack.c.l.b16 %v655
  %v937 = vunpack.c.h.b16 %v655
  %v938 = vunpack.c.l.b16 %v656
  %v939 = vunpack.c.h.b16 %v656
  %v940 = vunpack.c.l.b16 %v657
  %v941 = vunpack.c.h.b16 %v657
  %v942 = vunpack.c.l.b16 %v658
  %v943 = vunpack.c.h.b16 %v658
  %v944 = vunpack.c.l.b16 %v659
  %v945 = vunpack.c.h.b16 %v659
  %v946 = vunpack.c.l.b16 %v660
  %v947 = vunpack.c.h.b16 %v660
  %v948 = vunpack.c.l.b16 %v661
  %v949 = vunpack.c.h.b16 %v661
  %v950 = vpack.c.b16 %v888, %v886
  %v951 = vpack.c.b16 %v889, %v887
  %v952 = vpack.c.b16 %v892, %v890
  %v953 = vpack.c.b16 %v893, %v891
  %v954 = vpack.c.b16 %v896, %v894
  %v955 = vpack.c.b16 %v897, %v895
  %v956 = vpack.c.b16 %v900, %v898
  %v957 = vpack.c.b16 %v901, %v899
  %v958 = vpack.c.b16 %v904, %v902
  %v959 = vpack.c.b16 %v905, %v903
  %v960 = vpack.c.b16 %v908, %v906
  %v961 = vpack.c.b16 %v909, %v907
  %v962 = vpack.c.b16 %v912, %v910
  %v963 = vpack.c.b16 %v913, %v911
  %v964 = vpack.c.b16 %v916, %v914
  %v965 = vpack.c.b16 %v917, %v915
  %v966 = vpack.c.b16 %v920, %v918
  %v967 = vpack.c.b16 %v921, %v919
  %v968 = vpack.c.b16 %v924, %v922
  %v969 = vpack.c.b16 %v925, %v923
  %v970 = vpack.c.b16 %v928, %v926
  %v971 = vpack.c.b16 %v929, %v927
  %v972 = vpack.c.b16 %v932, %v930
  %v973 = vpack.c.b16 %v933, %v931
  %v974 = vpack.c.b16 %v936, %v934
  %v975 = vpack.c.b16 %v937, %v935
  %v976 = vpack.c.b16 %v940, %v938
  %v977 = vpack.c.b16 %v941, %v939
  %v978 = vpack.c.b16 %v944, %v942
  %v979 = vpack.c.b16 %v945, %v943
  %v980 = vpack.c.b16 %v948, %v946
  %v981 = vpack.c.b16 %v949, %v947
  %1014 = vmatpush.bf16.msra.mxu0 %v621
  %1015 = vmatpush.bf16.msra.mxu0 %v620
  %1016 = vmatpush.bf16.msra.mxu0 %v619
  %1017 = vmatpush.bf16.msra.mxu0 %v618
  %1018 = vmatpush.bf16.msra.mxu0 %v617
  %1019 = vmatpush.bf16.msra.mxu0 %v616
  %1020 = vmatpush.bf16.msra.mxu0 %v615
  %1021 = vmatpush.bf16.msra.mxu0 %v614
  %1022 = vmatmul.bf16.gmra.mxu0 %v950
  %v1023 = vpop.f32.mrf.mxu0
  %v1024 = vadd.f32 %v697, %v1023
  %v1025 = vpop.f32.mrf.mxu0
  %v1026 = vadd.f32 %v702, %v1025
  %1027 = vmatmul.bf16.gmra.mxu0 %v952
  %v1028 = vpop.f32.mrf.mxu0
  %v1029 = vadd.f32 %v707, %v1028
  %v1030 = vpop.f32.mrf.mxu0
  %v1031 = vadd.f32 %v712, %v1030
  %1032 = vmatmul.bf16.gmra.mxu0 %v954
  %v1033 = vpop.f32.mrf.mxu0
  %v1034 = vadd.f32 %v717, %v1033
  %v1035 = vpop.f32.mrf.mxu0
  %v1036 = vadd.f32 %v722, %v1035
  %1037 = vmatmul.bf16.gmra.mxu0 %v956
  %v1038 = vpop.f32.mrf.mxu0
  %v1039 = vadd.f32 %v727, %v1038
  %v1040 = vpop.f32.mrf.mxu0
  %v1041 = vadd.f32 %v732, %v1040
  %1042 = vmatmul.bf16.gmra.mxu0 %v958
  %v1043 = vpop.f32.mrf.mxu0
  %v1044 = vadd.f32 %v737, %v1043
  %v1045 = vpop.f32.mrf.mxu0
  %v1046 = vadd.f32 %v742, %v1045
  %1047 = vmatmul.bf16.gmra.mxu0 %v960
  %v1048 = vpop.f32.mrf.mxu0
  %v1049 = vadd.f32 %v747, %v1048
  %v1050 = vpop.f32.mrf.mxu0
  %v1051 = vadd.f32 %v752, %v1050
  %1052 = vmatmul.bf16.gmra.mxu0 %v962
  %v1053 = vpop.f32.mrf.mxu0
  %v1054 = vadd.f32 %v757, %v1053
  %v1055 = vpop.f32.mrf.mxu0
  %v1056 = vadd.f32 %v762, %v1055
  %1057 = vmatmul.bf16.gmra.mxu0 %v964
  %v1058 = vpop.f32.mrf.mxu0
  %v1059 = vadd.f32 %v767, %v1058
  %v1060 = vpop.f32.mrf.mxu0
  %v1061 = vadd.f32 %v772, %v1060
  %1062 = vmatmul.bf16.gmra.mxu0 %v966
  %v1063 = vpop.f32.mrf.mxu0
  %v1064 = vadd.f32 %v777, %v1063
  %v1065 = vpop.f32.mrf.mxu0
  %v1066 = vadd.f32 %v782, %v1065
  %1067 = vmatmul.bf16.gmra.mxu0 %v968
  %v1068 = vpop.f32.mrf.mxu0
  %v1069 = vadd.f32 %v787, %v1068
  %v1070 = vpop.f32.mrf.mxu0
  %v1071 = vadd.f32 %v792, %v1070
  %1072 = vmatmul.bf16.gmra.mxu0 %v970
  %v1073 = vpop.f32.mrf.mxu0
  %v1074 = vadd.f32 %v797, %v1073
  %v1075 = vpop.f32.mrf.mxu0
  %v1076 = vadd.f32 %v802, %v1075
  %1077 = vmatmul.bf16.gmra.mxu0 %v972
  %v1078 = vpop.f32.mrf.mxu0
  %v1079 = vadd.f32 %v807, %v1078
  %v1080 = vpop.f32.mrf.mxu0
  %v1081 = vadd.f32 %v812, %v1080
  %1082 = vmatmul.bf16.gmra.mxu0 %v974
  %v1083 = vpop.f32.mrf.mxu0
  %v1084 = vadd.f32 %v817, %v1083
  %v1085 = vpop.f32.mrf.mxu0
  %v1086 = vadd.f32 %v822, %v1085
  %1087 = vmatmul.bf16.gmra.mxu0 %v976
  %v1088 = vpop.f32.mrf.mxu0
  %v1089 = vadd.f32 %v827, %v1088
  %v1090 = vpop.f32.mrf.mxu0
  %v1091 = vadd.f32 %v832, %v1090
  %1092 = vmatmul.bf16.gmra.mxu0 %v978
  %v1093 = vpop.f32.mrf.mxu0
  %v1094 = vadd.f32 %v837, %v1093
  %v1095 = vpop.f32.mrf.mxu0
  %v1096 = vadd.f32 %v842, %v1095
  %1097 = vmatmul.bf16.gmra.mxu0 %v980
  %v1098 = vpop.f32.mrf.mxu0
  %v1099 = vadd.f32 %v847, %v1098
  %v1100 = vpop.f32.mrf.mxu0
  %v1101 = vadd.f32 %v852, %v1100
  %1102 = vdwg.mxu0
  %1103 = vmatpush.bf16.msra.mxu0 %v629
  %1104 = vmatpush.bf16.msra.mxu0 %v628
  %1105 = vmatpush.bf16.msra.mxu0 %v627
  %1106 = vmatpush.bf16.msra.mxu0 %v626
  %1107 = vmatpush.bf16.msra.mxu0 %v625
  %1108 = vmatpush.bf16.msra.mxu0 %v624
  %1109 = vmatpush.bf16.msra.mxu0 %v623
  %1110 = vmatpush.bf16.msra.mxu0 %v622
  %1111 = vmatmul.bf16.gmra.mxu0 %v951
  %v1112 = vpop.f32.mrf.mxu0
  %v1113 = vadd.f32 %v1024, %v1112
  %v1114 = vpop.f32.mrf.mxu0
  %v1115 = vadd.f32 %v1026, %v1114
  %1116 = vmatmul.bf16.gmra.mxu0 %v953
  %v1117 = vpop.f32.mrf.mxu0
  %v1118 = vadd.f32 %v1029, %v1117
  %v1119 = vpop.f32.mrf.mxu0
  %v1120 = vadd.f32 %v1031, %v1119
  %1121 = vmatmul.bf16.gmra.mxu0 %v955
  %v1122 = vpop.f32.mrf.mxu0
  %v1123 = vadd.f32 %v1034, %v1122
  %v1124 = vpop.f32.mrf.mxu0
  %v1125 = vadd.f32 %v1036, %v1124
  %1126 = vmatmul.bf16.gmra.mxu0 %v957
  %v1127 = vpop.f32.mrf.mxu0
  %v1128 = vadd.f32 %v1039, %v1127
  %v1129 = vpop.f32.mrf.mxu0
  %v1130 = vadd.f32 %v1041, %v1129
  %1131 = vmatmul.bf16.gmra.mxu0 %v959
  %v1132 = vpop.f32.mrf.mxu0
  %v1133 = vadd.f32 %v1044, %v1132
  %v1134 = vpop.f32.mrf.mxu0
  %v1135 = vadd.f32 %v1046, %v1134
  %1136 = vmatmul.bf16.gmra.mxu0 %v961
  %v1137 = vpop.f32.mrf.mxu0
  %v1138 = vadd.f32 %v1049, %v1137
  %v1139 = vpop.f32.mrf.mxu0
  %v1140 = vadd.f32 %v1051, %v1139
  %1141 = vmatmul.bf16.gmra.mxu0 %v963
  %v1142 = vpop.f32.mrf.mxu0
  %v1143 = vadd.f32 %v1054, %v1142
  %v1144 = vpop.f32.mrf.mxu0
  %v1145 = vadd.f32 %v1056, %v1144
  %1146 = vmatmul.bf16.gmra.mxu0 %v965
  %v1147 = vpop.f32.mrf.mxu0
  %v1148 = vadd.f32 %v1059, %v1147
  %v1149 = vpop.f32.mrf.mxu0
  %v1150 = vadd.f32 %v1061, %v1149
  %1151 = vmatmul.bf16.gmra.mxu0 %v967
  %v1152 = vpop.f32.mrf.mxu0
  %v1153 = vadd.f32 %v1064, %v1152
  %v1154 = vpop.f32.mrf.mxu0
  %v1155 = vadd.f32 %v1066, %v1154
  %1156 = vmatmul.bf16.gmra.mxu0 %v969
  %v1157 = vpop.f32.mrf.mxu0
  %v1158 = vadd.f32 %v1069, %v1157
  %v1159 = vpop.f32.mrf.mxu0
  %v1160 = vadd.f32 %v1071, %v1159
  %1161 = vmatmul.bf16.gmra.mxu0 %v971
  %v1162 = vpop.f32.mrf.mxu0
  %v1163 = vadd.f32 %v1074, %v1162
  %v1164 = vpop.f32.mrf.mxu0
  %v1165 = vadd.f32 %v1076, %v1164
  %1166 = vmatmul.bf16.gmra.mxu0 %v973
  %v1167 = vpop.f32.mrf.mxu0
  %v1168 = vadd.f32 %v1079, %v1167
  %v1169 = vpop.f32.mrf.mxu0
  %v1170 = vadd.f32 %v1081, %v1169
  %1171 = vmatmul.bf16.gmra.mxu0 %v975
  %v1172 = vpop.f32.mrf.mxu0
  %v1173 = vadd.f32 %v1084, %v1172
  %v1174 = vpop.f32.mrf.mxu0
  %v1175 = vadd.f32 %v1086, %v1174
  %1176 = vmatmul.bf16.gmra.mxu0 %v977
  %v1177 = vpop.f32.mrf.mxu0
  %v1178 = vadd.f32 %v1089, %v1177
  %v1179 = vpop.f32.mrf.mxu0
  %v1180 = vadd.f32 %v1091, %v1179
  %1181 = vmatmul.bf16.gmra.mxu0 %v979
  %v1182 = vpop.f32.mrf.mxu0
  %v1183 = vadd.f32 %v1094, %v1182
  %v1184 = vpop.f32.mrf.mxu0
  %v1185 = vadd.f32 %v1096, %v1184
  %1186 = vmatmul.bf16.gmra.mxu0 %v981
  %v1187 = vpop.f32.mrf.mxu0
  %v1188 = vadd.f32 %v1099, %v1187
  %v1189 = vpop.f32.mrf.mxu0
  %v1190 = vadd.f32 %v1101, %v1189
  %1191 = vdwg.mxu0
  %v1192 = vmax.f32 %v1113, 0.0
  %v1193 = vmax.f32 %v1115, 0.0
  %v1194 = vmax.f32 %v1118, 0.0
  %v1195 = vmax.f32 %v1120, 0.0
  %v1196 = vmax.f32 %v1123, 0.0
  %v1197 = vmax.f32 %v1125, 0.0
  %v1198 = vmax.f32 %v1128, 0.0
  %v1199 = vmax.f32 %v1130, 0.0
  %v1200 = vmax.f32 %v1133, 0.0
  %v1201 = vmax.f32 %v1135, 0.0
  %v1202 = vmax.f32 %v1138, 0.0
  %v1203 = vmax.f32 %v1140, 0.0
  %v1204 = vmax.f32 %v1143, 0.0
  %v1205 = vmax.f32 %v1145, 0.0
  %v1206 = vmax.f32 %v1148, 0.0
  %v1207 = vmax.f32 %v1150, 0.0
  %v1208 = vmax.f32 %v1153, 0.0
  %v1209 = vmax.f32 %v1155, 0.0
  %v1210 = vmax.f32 %v1158, 0.0
  %v1211 = vmax.f32 %v1160, 0.0
  %v1212 = vmax.f32 %v1163, 0.0
  %v1213 = vmax.f32 %v1165, 0.0
  %v1214 = vmax.f32 %v1168, 0.0
  %v1215 = vmax.f32 %v1170, 0.0
  %v1216 = vmax.f32 %v1173, 0.0
  %v1217 = vmax.f32 %v1175, 0.0
  %v1218 = vmax.f32 %v1178, 0.0
  %v1219 = vmax.f32 %v1180, 0.0
  %v1220 = vmax.f32 %v1183, 0.0
  %v1221 = vmax.f32 %v1185, 0.0
  %v1222 = vmax.f32 %v1188, 0.0
  %v1223 = vmax.f32 %v1190, 0.0
  %v1224 = vld [vmem:[%s5] sm:$0xff]
  %v1225 = vld [vmem:[%s5 + $0x8] sm:$0xff]
  %v1226 = vld [vmem:[%s5 + $0x10] sm:$0xff]
  %v1227 = vld [vmem:[%s5 + $0x18] sm:$0xff]
  %v1228 = vld [vmem:[%s5 + $0x20] sm:$0xff]
  %v1229 = vld [vmem:[%s5 + $0x28] sm:$0xff]
  %v1230 = vld [vmem:[%s5 + $0x30] sm:$0xff]
  %v1231 = vld [vmem:[%s5 + $0x38] sm:$0xff]
  %v1232 = vld [vmem:[%s5 + $0x40] sm:$0xff]
  %v1233 = vld [vmem:[%s5 + $0x48] sm:$0xff]
  %v1234 = vld [vmem:[%s5 + $0x50] sm:$0xff]
  %v1235 = vld [vmem:[%s5 + $0x58] sm:$0xff]
  %v1236 = vld [vmem:[%s5 + $0x60] sm:$0xff]
  %v1237 = vld [vmem:[%s5 + $0x68] sm:$0xff]
  %v1238 = vld [vmem:[%s5 + $0x70] sm:$0xff]
  %v1239 = vld [vmem:[%s5 + $0x78] sm:$0xff]
  %v1240 = vld [vmem:[%s5 + $0x80] sm:$0xff]
  %v1241 = vld [vmem:[%s5 + $0x88] sm:$0xff]
  %v1242 = vld [vmem:[%s5 + $0x90] sm:$0xff]
  %v1243 = vld [vmem:[%s5 + $0x98] sm:$0xff]
  %v1244 = vld [vmem:[%s5 + $0xa0] sm:$0xff]
  %v1245 = vld [vmem:[%s5 + $0xa8] sm:$0xff]
  %v1246 = vld [vmem:[%s5 + $0xb0] sm:$0xff]
  %v1247 = vld [vmem:[%s5 + $0xb8] sm:$0xff]
  %v1248 = vld [vmem:[%s5 + $0xc0] sm:$0xff]
  %v1249 = vld [vmem:[%s5 + $0xc8] sm:$0xff]
  %v1250 = vld [vmem:[%s5 + $0xd0] sm:$0xff]
  %v1251 = vld [vmem:[%s5 + $0xd8] sm:$0xff]
  %v1252 = vld [vmem:[%s5 + $0xe0] sm:$0xff]
  %v1253 = vld [vmem:[%s5 + $0xe8] sm:$0xff]
  %v1254 = vld [vmem:[%s5 + $0xf0] sm:$0xff]
  %v1255 = vld [vmem:[%s5 + $0xf8] sm:$0xff]
  %1257 = vset.pattern.permute.xlu0 0
  %1258 = vperm.xlu0 %1257, %v1224
  %v1259 = vpop.permute.xlu0 %1258
  %1262 = vset.pattern.permute.xlu0 0
  %1263 = vperm.xlu0 %1262, %v1225
  %v1264 = vpop.permute.xlu0 %1263
  %1267 = vset.pattern.permute.xlu0 0
  %1268 = vperm.xlu0 %1267, %v1226
  %v1269 = vpop.permute.xlu0 %1268
  %1272 = vset.pattern.permute.xlu0 0
  %1273 = vperm.xlu0 %1272, %v1227
  %v1274 = vpop.permute.xlu0 %1273
  %1277 = vset.pattern.permute.xlu0 0
  %1278 = vperm.xlu0 %1277, %v1228
  %v1279 = vpop.permute.xlu0 %1278
  %1282 = vset.pattern.permute.xlu0 0
  %1283 = vperm.xlu0 %1282, %v1229
  %v1284 = vpop.permute.xlu0 %1283
  %1287 = vset.pattern.permute.xlu0 0
  %1288 = vperm.xlu0 %1287, %v1230
  %v1289 = vpop.permute.xlu0 %1288
  %1292 = vset.pattern.permute.xlu0 0
  %1293 = vperm.xlu0 %1292, %v1231
  %v1294 = vpop.permute.xlu0 %1293
  %1297 = vset.pattern.permute.xlu0 0
  %1298 = vperm.xlu0 %1297, %v1232
  %v1299 = vpop.permute.xlu0 %1298
  %1302 = vset.pattern.permute.xlu0 0
  %1303 = vperm.xlu0 %1302, %v1233
  %v1304 = vpop.permute.xlu0 %1303
  %1307 = vset.pattern.permute.xlu0 0
  %1308 = vperm.xlu0 %1307, %v1234
  %v1309 = vpop.permute.xlu0 %1308
  %1312 = vset.pattern.permute.xlu0 0
  %1313 = vperm.xlu0 %1312, %v1235
  %v1314 = vpop.permute.xlu0 %1313
  %1317 = vset.pattern.permute.xlu0 0
  %1318 = vperm.xlu0 %1317, %v1236
  %v1319 = vpop.permute.xlu0 %1318
  %1322 = vset.pattern.permute.xlu0 0
  %1323 = vperm.xlu0 %1322, %v1237
  %v1324 = vpop.permute.xlu0 %1323
  %1327 = vset.pattern.permute.xlu0 0
  %1328 = vperm.xlu0 %1327, %v1238
  %v1329 = vpop.permute.xlu0 %1328
  %1332 = vset.pattern.permute.xlu0 0
  %1333 = vperm.xlu0 %1332, %v1239
  %v1334 = vpop.permute.xlu0 %1333
  %1337 = vset.pattern.permute.xlu0 0
  %1338 = vperm.xlu0 %1337, %v1240
  %v1339 = vpop.permute.xlu0 %1338
  %1342 = vset.pattern.permute.xlu0 0
  %1343 = vperm.xlu0 %1342, %v1241
  %v1344 = vpop.permute.xlu0 %1343
  %1347 = vset.pattern.permute.xlu0 0
  %1348 = vperm.xlu0 %1347, %v1242
  %v1349 = vpop.permute.xlu0 %1348
  %1352 = vset.pattern.permute.xlu0 0
  %1353 = vperm.xlu0 %1352, %v1243
  %v1354 = vpop.permute.xlu0 %1353
  %1357 = vset.pattern.permute.xlu0 0
  %1358 = vperm.xlu0 %1357, %v1244
  %v1359 = vpop.permute.xlu0 %1358
  %1362 = vset.pattern.permute.xlu0 0
  %1363 = vperm.xlu0 %1362, %v1245
  %v1364 = vpop.permute.xlu0 %1363
  %1367 = vset.pattern.permute.xlu0 0
  %1368 = vperm.xlu0 %1367, %v1246
  %v1369 = vpop.permute.xlu0 %1368
  %1372 = vset.pattern.permute.xlu0 0
  %1373 = vperm.xlu0 %1372, %v1247
  %v1374 = vpop.permute.xlu0 %1373
  %1377 = vset.pattern.permute.xlu0 0
  %1378 = vperm.xlu0 %1377, %v1248
  %v1379 = vpop.permute.xlu0 %1378
  %1382 = vset.pattern.permute.xlu0 0
  %1383 = vperm.xlu0 %1382, %v1249
  %v1384 = vpop.permute.xlu0 %1383
  %1387 = vset.pattern.permute.xlu0 0
  %1388 = vperm.xlu0 %1387, %v1250
  %v1389 = vpop.permute.xlu0 %1388
  %1392 = vset.pattern.permute.xlu0 0
  %1393 = vperm.xlu0 %1392, %v1251
  %v1394 = vpop.permute.xlu0 %1393
  %1397 = vset.pattern.permute.xlu0 0
  %1398 = vperm.xlu0 %1397, %v1252
  %v1399 = vpop.permute.xlu0 %1398
  %1402 = vset.pattern.permute.xlu0 0
  %1403 = vperm.xlu0 %1402, %v1253
  %v1404 = vpop.permute.xlu0 %1403
  %1407 = vset.pattern.permute.xlu0 0
  %1408 = vperm.xlu0 %1407, %v1254
  %v1409 = vpop.permute.xlu0 %1408
  %1412 = vset.pattern.permute.xlu0 0
  %1413 = vperm.xlu0 %1412, %v1255
  %v1414 = vpop.permute.xlu0 %1413
  %v1416 = vmul.f32 %v1192, %v1259
  %v1417 = vmul.f32 %v1193, %v1264
  %v1418 = vmul.f32 %v1194, %v1269
  %v1419 = vmul.f32 %v1195, %v1274
  %v1420 = vmul.f32 %v1196, %v1279
  %v1421 = vmul.f32 %v1197, %v1284
  %v1422 = vmul.f32 %v1198, %v1289
  %v1423 = vmul.f32 %v1199, %v1294
  %v1424 = vmul.f32 %v1200, %v1299
  %v1425 = vmul.f32 %v1201, %v1304
  %v1426 = vmul.f32 %v1202, %v1309
  %v1427 = vmul.f32 %v1203, %v1314
  %v1428 = vmul.f32 %v1204, %v1319
  %v1429 = vmul.f32 %v1205, %v1324
  %v1430 = vmul.f32 %v1206, %v1329
  %v1431 = vmul.f32 %v1207, %v1334
  %v1432 = vmul.f32 %v1208, %v1339
  %v1433 = vmul.f32 %v1209, %v1344
  %v1434 = vmul.f32 %v1210, %v1349
  %v1435 = vmul.f32 %v1211, %v1354
  %v1436 = vmul.f32 %v1212, %v1359
  %v1437 = vmul.f32 %v1213, %v1364
  %v1438 = vmul.f32 %v1214, %v1369
  %v1439 = vmul.f32 %v1215, %v1374
  %v1440 = vmul.f32 %v1216, %v1379
  %v1441 = vmul.f32 %v1217, %v1384
  %v1442 = vmul.f32 %v1218, %v1389
  %v1443 = vmul.f32 %v1219, %v1394
  %v1444 = vmul.f32 %v1220, %v1399
  %v1445 = vmul.f32 %v1221, %v1404
  %v1446 = vmul.f32 %v1222, %v1409
  %v1447 = vmul.f32 %v1223, %v1414
  %v1448 = vadd.f32 %v1416, %v1417
  %v1449 = vadd.f32 %v1448, %v1418
  %v1450 = vadd.f32 %v1449, %v1419
  %v1451 = vadd.f32 %v1450, %v1420
  %v1452 = vadd.f32 %v1451, %v1421
  %v1453 = vadd.f32 %v1452, %v1422
  %v1454 = vadd.f32 %v1453, %v1423
  %v1455 = vadd.f32 %v1454, %v1424
  %v1456 = vadd.f32 %v1455, %v1425
  %v1457 = vadd.f32 %v1456, %v1426
  %v1458 = vadd.f32 %v1457, %v1427
  %v1459 = vadd.f32 %v1458, %v1428
  %v1460 = vadd.f32 %v1459, %v1429
  %v1461 = vadd.f32 %v1460, %v1430
  %v1462 = vadd.f32 %v1461, %v1431
  %v1463 = vadd.f32 %v1462, %v1432
  %v1464 = vadd.f32 %v1463, %v1433
  %v1465 = vadd.f32 %v1464, %v1434
  %v1466 = vadd.f32 %v1465, %v1435
  %v1467 = vadd.f32 %v1466, %v1436
  %v1468 = vadd.f32 %v1467, %v1437
  %v1469 = vadd.f32 %v1468, %v1438
  %v1470 = vadd.f32 %v1469, %v1439
  %v1471 = vadd.f32 %v1470, %v1440
  %v1472 = vadd.f32 %v1471, %v1441
  %v1473 = vadd.f32 %v1472, %v1442
  %v1474 = vadd.f32 %v1473, %v1443
  %v1475 = vadd.f32 %v1474, %v1444
  %v1476 = vadd.f32 %v1475, %v1445
  %v1477 = vadd.f32 %v1476, %v1446
  %v1478 = vadd.f32 %v1477, %v1447
  %v1479 = vrot.slane %v1478, 4
  %v1480 = vadd.f32 %v1478, %v1479
  %v1481 = vrot.slane %v1480, 2
  %v1482 = vadd.f32 %v1480, %v1481
  %v1483 = vrot.slane %v1482, 1
  %v1484 = vadd.f32 %v1482, %v1483
  %v1485 = vld [vmem:[#allocation2] sm:$0x1]
  %1487 = vset.pattern.permute.xlu0 0
  %1488 = vperm.xlu0 %1487, %v1485
  %v1489 = vpop.permute.xlu0 %1488
  %v1491 = vperm.slane %v1489, 0
  %v1492 = vadd.f32 %v1484, %v1491
  %1493 = vst [vmem:[%s7] sm:$0x1] %v1492
  // Predicated region
  $region30: #{reward_model_forward.1} parent=0 // pred_check
    _
  $region31: #{reward_model_forward.1} parent=0 // pred_check_branch
    %1495 = sbr.rel (0) target = $region33
  $region32: #{reward_model_forward.1} parent=0 // pred_region
    _
  $region33: #{reward_model_forward.1} parent=0 // pred_fallthru
    _
  // Predicated region
  $region34: #{reward_model_forward.1} parent=0 // pred_check
    _
  $region35: #{reward_model_forward.1} parent=0 // pred_check_branch
    %1497 = sbr.rel (0) target = $region37
  $region36: #{reward_model_forward.1} parent=0 // pred_region
    _
  $region37: #{reward_model_forward.1} parent=0 // pred_fallthru
    _

</llo_original>
